<compile_context>
chip_gen: v7x
topology: tpu7x:2x2x1
jax: 0.10.0
libtpu: 0.0.40
codegen_flags: <defaults>
</compile_context>

<pallas_src>
import math
import functools

import numpy as np
import jax
import jax.numpy as jnp
from jax.experimental import pallas as pl
from jax.experimental.pallas import tpu as pltpu

EMBD = 256
N_HEAD = 4
HEAD_DIM = EMBD // N_HEAD


# ---------------------------------------------------------------------------
# Tiled linear kernel:  out = x @ W + b   (bf16 MXU operands, f32 accumulate)
# ---------------------------------------------------------------------------
def _linear_kernel(x_ref, w_ref, b_ref, o_ref):
    xb = x_ref[...].astype(jnp.bfloat16)          # cheap pack; no-op if already bf16
    acc = jnp.dot(xb, w_ref[...], preferred_element_type=jnp.float32)
    o_ref[...] = (acc + b_ref[...]).astype(o_ref.dtype)


def pallas_linear(x2d, w_bf16, b_f32, *, out_dtype=jnp.float32, tm=512):
    """x2d: (M, K) f32/bf16, w: (K, N) bf16, b: (N,) f32 -> (M, N) out_dtype."""
    M, K = x2d.shape
    Kw, N = w_bf16.shape
    assert K == Kw
    TM = M if M <= tm else tm                     # tile over M for pipelining
    if TM != M:
        assert TM % 8 == 0
    grid = (pl.cdiv(M, TM),)
    b2d = b_f32.reshape(1, N)

    cost = pl.CostEstimate(
        flops=2 * M * K * N,
        transcendentals=0,
        bytes_accessed=(M * K * x2d.dtype.itemsize
                        + K * N * w_bf16.dtype.itemsize
                        + N * 4
                        + M * N * np.dtype(out_dtype).itemsize),
    )
    return pl.pallas_call(
        _linear_kernel,
        out_shape=jax.ShapeDtypeStruct((M, N), out_dtype),
        grid_spec=pltpu.PrefetchScalarGridSpec(
            num_scalar_prefetch=0,
            grid=grid,
            in_specs=[
                pl.BlockSpec((TM, K), lambda i: (i, 0)),   # pipelined over rows
                pl.BlockSpec((K, N), lambda i: (0, 0)),    # weight resident
                pl.BlockSpec((1, N), lambda i: (0, 0)),    # bias resident
            ],
            out_specs=pl.BlockSpec((TM, N), lambda i: (i, 0)),
        ),
        compiler_params=pltpu.CompilerParams(
            dimension_semantics=("parallel",),             # megacore-shardable
            vmem_limit_bytes=48 * 1024 * 1024),            # < v7x 64 MiB physical
        cost_estimate=cost,
    )(x2d, w_bf16, b2d)


# ---------------------------------------------------------------------------
# Causal attention kernel: one batch per grid step, all heads per step.
# Reads the fused (S, 3*EMBD) QKV slab, writes a lane-dense (S, EMBD) slab.
# ---------------------------------------------------------------------------
def _attn_kernel(qkv_ref, o_ref, *, n_head, head_dim, embd):
    S = qkv_ref.shape[0]
    qkv = qkv_ref[...]                                        # (S, 3*embd) bf16
    row = jax.lax.broadcasted_iota(jnp.int32, (S, S), 0)
    col = jax.lax.broadcasted_iota(jnp.int32, (S, S), 1)
    causal = col <= row                                       # shared by all heads

    for h in range(n_head):                                   # static unroll
        lo = h * head_dim
        q = qkv[:, lo:lo + head_dim]                          # bf16 (S, D)
        k = qkv[:, embd + lo:embd + lo + head_dim]
        v = qkv[:, 2 * embd + lo:2 * embd + lo + head_dim]

        # QK^T without an explicit transpose: contract last dims of both.
        # (1/sqrt(head_dim) was folded into the q weights at prep time.)
        s = jax.lax.dot_general(q, k, (((1,), (1,)), ((), ())),
                                preferred_element_type=jnp.float32)   # (S, S) f32
        s = jnp.where(causal, s, -jnp.inf)
        m = jnp.max(s, axis=-1, keepdims=True)
        p = jnp.exp(s - m)                                    # f32 softmax numerator
        l = jnp.sum(p, axis=-1, keepdims=True)

        o = jnp.dot(p.astype(jnp.bfloat16), v,
                    preferred_element_type=jnp.float32)       # (S, D) f32
        # Deferred normalization on the small (S, D) output; EUP reciprocal.
        o = o * pl.reciprocal(l, approx=True)
        o_ref[:, lo:lo + head_dim] = o.astype(o_ref.dtype)


def pallas_causal_attention(qkv2d, batch, seq):
    """qkv2d: (batch*seq, 3*EMBD) bf16 -> (batch*seq, EMBD) bf16."""
    M, threeE = qkv2d.shape
    embd = threeE // 3
    assert M == batch * seq and embd == EMBD
    assert seq % 8 == 0 or batch == 1, "seq block must satisfy the (8,128) rule"

    cost = pl.CostEstimate(
        flops=4 * batch * N_HEAD * seq * seq * HEAD_DIM,
        transcendentals=batch * N_HEAD * seq * seq,
        bytes_accessed=M * threeE * qkv2d.dtype.itemsize + M * embd * 2,
    )
    kern = functools.partial(_attn_kernel, n_head=N_HEAD,
                             head_dim=HEAD_DIM, embd=embd)
    return pl.pallas_call(
        kern,
        out_shape=jax.ShapeDtypeStruct((M, embd), jnp.bfloat16),
        grid_spec=pltpu.PrefetchScalarGridSpec(
            num_scalar_prefetch=0,
            grid=(batch,),
            in_specs=[pl.BlockSpec((seq, threeE), lambda i: (i, 0))],
            out_specs=pl.BlockSpec((seq, embd), lambda i: (i, 0)),
        ),
        compiler_params=pltpu.CompilerParams(
            dimension_semantics=("parallel",),
            vmem_limit_bytes=48 * 1024 * 1024),
        cost_estimate=cost,
    )(qkv2d)


# ---------------------------------------------------------------------------
# Parameters
# ---------------------------------------------------------------------------
def init_params(key, embd=EMBD):
    """Deterministic init mimicking nn.Linear default (uniform ±1/sqrt(in))."""
    bound = 1.0 / math.sqrt(embd)
    names = ["q", "k", "v", "out"]
    keys = jax.random.split(key, 2 * len(names))
    params = {}
    for i, n in enumerate(names):
        w = jax.random.uniform(keys[2 * i], (embd, embd), jnp.float32,
                               minval=-bound, maxval=bound)   # (in, out)
        b = jax.random.uniform(keys[2 * i + 1], (embd,), jnp.float32,
                               minval=-bound, maxval=bound)
        params[n + "_w"] = w
        params[n + "_b"] = b
    return params


def prepare_kernel_params(params):
    """Fuse Q/K/V, fold 1/sqrt(head_dim) into q, cast MXU weights to bf16."""
    scale = 1.0 / math.sqrt(HEAD_DIM)
    qkv_w = jnp.concatenate(
        [params["q_w"] * scale, params["k_w"], params["v_w"]], axis=1)
    qkv_b = jnp.concatenate(
        [params["q_b"] * scale, params["k_b"], params["v_b"]], axis=0)
    return {
        "qkv_w": qkv_w.astype(jnp.bfloat16),          # (EMBD, 3*EMBD)
        "qkv_b": qkv_b.astype(jnp.float32),           # (3*EMBD,)
        "out_w": params["out_w"].astype(jnp.bfloat16),
        "out_b": params["out_b"].astype(jnp.float32),
    }


# ---------------------------------------------------------------------------
# Forward
# ---------------------------------------------------------------------------
def dot_product_attention_forward(kparams, x):
    """x: (b, seq, embd) f32. Self-attention (kv=None, cache=None), causal, eval."""
    b, s, e = x.shape
    x2d = x.reshape(b * s, e)

    # One fused QKV GEMM; bf16 output halves the attention kernel's input DMA.
    qkv = pallas_linear(x2d, kparams["qkv_w"], kparams["qkv_b"],
                        out_dtype=jnp.bfloat16)                 # (b*s, 3*EMBD)

    # Heads are contiguous 64-wide column slices of the flat slab -> no
    # split_heads / merge transposes outside the kernel.
    o = pallas_causal_attention(qkv, b, s)                      # (b*s, EMBD) bf16

    out = pallas_linear(o, kparams["out_w"], kparams["out_b"],
                        out_dtype=jnp.float32)                  # (b*s, EMBD)
    return out.reshape(b, s, e)


def reference_forward(params, x):
    """Pure-JAX f32 reference of the same forward (sanity check)."""
    b, s, e = x.shape
    x2d = x.reshape(b * s, e)
    q = x2d @ params["q_w"] + params["q_b"]
    k = x2d @ params["k_w"] + params["k_b"]
    v = x2d @ params["v_w"] + params["v_b"]

    def sh(t):
        return t.reshape(b, s, N_HEAD, HEAD_DIM).transpose(0, 2, 1, 3)

    qh, kh, vh = sh(q), sh(k), sh(v)
    scores = jnp.einsum("bhqd,bhkd->bhqk", qh, kh) / math.sqrt(HEAD_DIM)
    mask = jnp.tril(jnp.ones((s, s), bool))
    scores = jnp.where(mask, scores, -jnp.inf)
    p = jax.nn.softmax(scores, axis=-1)
    oh = jnp.einsum("bhqk,bhkd->bhqd", p, vh)
    o = oh.transpose(0, 2, 1, 3).reshape(b * s, e)
    out = o @ params["out_w"] + params["out_b"]
    return out.reshape(b, s, e)


if __name__ == "__main__":
    key = jax.random.PRNGKey(0)
    k_param, k_x = jax.random.split(key)
    params = init_params(k_param)
    kparams = prepare_kernel_params(params)

    batch, seq = 2, 8
    x = jax.random.normal(k_x, (batch, seq, EMBD), jnp.float32)

    out = dot_product_attention_forward(kparams, x)
    out = jax.block_until_ready(out)

    ref = reference_forward(params, x)
    assert out.shape == (batch, seq, EMBD)
    # bf16 MXU operands (f32 accumulation) + approx reciprocal => looser tolerance
    # than the all-f32 version; semantics are unchanged.
    assert jnp.allclose(out, ref, atol=3e-2, rtol=3e-2), "mismatch vs reference"

    print("KERNEL_OK")
</pallas_src>

<mosaic_0001>
module attributes {stable_mosaic.version = 11 : i64} {
  func.func @_linear_kernel(%arg0: i32, %arg1: memref<16x256xf32, #tpu.memory_space<vmem>>, %arg2: memref<256x768xbf16, #tpu.memory_space<vmem>>, %arg3: memref<1x768xf32, #tpu.memory_space<vmem>>, %arg4: memref<16x768xbf16, #tpu.memory_space<vmem>>) attributes {dimension_semantics = [#tpu.dimension_semantics<parallel>], iteration_bounds = array<i64: 1>, scalar_prefetch = 0 : i64, scratch_operands = 0 : i64, tpu.core_type = #tpu.core_type<tc>, window_params = [{transform_indices = @transform_0, window_bounds = array<i64: 16, 256>}, {pipeline_mode = #tpu.pipeline_mode<synchronous>, transform_indices = @transform_1, window_bounds = array<i64: 256, 768>}, {pipeline_mode = #tpu.pipeline_mode<synchronous>, transform_indices = @transform_2, window_bounds = array<i64: 1, 768>}, {transform_indices = @transform_3, window_bounds = array<i64: 16, 768>}]} {
    %c0 = arith.constant 0 : index
    %c0_0 = arith.constant 0 : index
    %0 = vector.load %arg1[%c0, %c0_0] : memref<16x256xf32, #tpu.memory_space<vmem>>, vector<16x256xf32>
    %1 = arith.truncf %0 : vector<16x256xf32> to vector<16x256xbf16>
    %c0_1 = arith.constant 0 : index
    %c0_2 = arith.constant 0 : index
    %2 = vector.load %arg2[%c0_1, %c0_2] : memref<256x768xbf16, #tpu.memory_space<vmem>>, vector<256x768xbf16>
    %cst = arith.constant dense<0.000000e+00> : vector<16x768xf32>
    %3 = tpu.matmul %1, %2, %cst {dimension_numbers = #tpu.dot_dimension_numbers<[1], [0], [0], [1], [0, 0, 1, 1], [], []>} : vector<16x256xbf16>, vector<256x768xbf16>, vector<16x768xf32> -> vector<16x768xf32>
    %c0_3 = arith.constant 0 : index
    %c0_4 = arith.constant 0 : index
    %4 = vector.load %arg3[%c0_3, %c0_4] : memref<1x768xf32, #tpu.memory_space<vmem>>, vector<1x768xf32>
    %5 = vector.broadcast %4 : vector<1x768xf32> to vector<16x768xf32>
    %6 = arith.addf %3, %5 : vector<16x768xf32>
    %7 = arith.truncf %6 : vector<16x768xf32> to vector<16x768xbf16>
    %c0_5 = arith.constant 0 : index
    %c0_6 = arith.constant 0 : index
    %8 = vector.load %arg4[%c0_5, %c0_6] : memref<16x768xbf16, #tpu.memory_space<vmem>>, vector<16x768xbf16>
    tpu.vector_store %arg4[%c0_5, %c0_6], %7 {strides = array<i32>} : memref<16x768xbf16, #tpu.memory_space<vmem>>, vector<16x768xbf16>,
    return
  }
  func.func @transform_0(%arg0: i32) -> (i32, i32) {
    %c0_i32 = arith.constant 0 : i32
    %c0_i32_0 = arith.constant 0 : i32
    return %arg0, %c0_i32 : i32, i32
  }
  func.func @transform_1(%arg0: i32) -> (i32, i32) {
    %c0_i32 = arith.constant 0 : i32
    %c0_i32_0 = arith.constant 0 : i32
    %c0_i32_1 = arith.constant 0 : i32
    return %c0_i32, %c0_i32_0 : i32, i32
  }
  func.func @transform_2(%arg0: i32) -> (i32, i32) {
    %c0_i32 = arith.constant 0 : i32
    %c0_i32_0 = arith.constant 0 : i32
    %c0_i32_1 = arith.constant 0 : i32
    return %c0_i32, %c0_i32_0 : i32, i32
  }
  func.func @transform_3(%arg0: i32) -> (i32, i32) {
    %c0_i32 = arith.constant 0 : i32
    %c0_i32_0 = arith.constant 0 : i32
    return %arg0, %c0_i32 : i32, i32
  }
}

</mosaic_0001>

<llo_original>
// kernel: tpu_custom_call.1
$region0: #{tpu_custom_call.1}
  #allocation0 [shape = 'u32[]', space=smem, size = 0x4, offset = 0x4, fixed_abs, tag = 'smem constant byte address 0x4 - core index']
  #allocation1 [shape = 'u32[144,128]{1,0:T(1,128)}', space=vmem, size = 0x12000, scoped, tag = 'internal scratch']
  %s0 = inlined_call_operand.hbm [shape: f32[16,256], index: 0, kind: input, shape index: {}]
  %s1 = inlined_call_operand.hbm [shape: bf16[256,768], index: 1, kind: input, shape index: {}]
  %s2 = inlined_call_operand.vmem [shape: f32[1,768], index: 2, kind: input, shape index: {}]
  %s3 = inlined_call_operand.hbm [shape: bf16[16,768], index: 3, kind: output, shape index: {}]
  %s4 = sld [smem:[#allocation0]]
  $region30: #{tpu_custom_call.1} parent=0
    _
  %s6 = ssub.s32 1, %s4
  %s7 = scalar_select 0, %s6, %s4
  $region1: #{tpu_custom_call.1} parent=0
    #allocation2 [shape = 'u8[16384]{0}', space=vmem, size = 0x4000, scoped, tag = 'input window, operand 0, single buffered']
    #allocation3 [shape = 's32[1]{0}', space=sflag, size = 0x4, scoped, tag = 'scoped memory for tpu_custom_call.1']
    #allocation4 [shape = 's32[1]{0}', space=sflag, size = 0x4, scoped, tag = 'scoped memory for tpu_custom_call.1']
    #allocation5 [shape = 'u8[393216]{0}', space=vmem, size = 0x60000, scoped, tag = 'input window, operand 1, single buffered']
    #allocation6 [shape = 's32[1]{0}', space=sflag, size = 0x4, scoped, tag = 'scoped memory for tpu_custom_call.1']
    #allocation7 [shape = 'u8[24576]{0}', space=vmem, size = 0x6000, scoped, tag = 'output window, operand 0, single buffered']
    %8 = vsyncpa [#allocation3], 0
    %9 = vsyncpa [#allocation6], 0
    %10 = vsyncpa [#allocation4], 0
    // Predicated region
    $region2: #{tpu_custom_call.1} parent=1 // pred_check
      _
    $region3: #{tpu_custom_call.1} parent=1 // pred_check_branch
      %12 = sbr.rel (0) target = $region5
    $region4: #{tpu_custom_call.1} parent=1 // pred_region
      %s14 = ssub.s32 512, 512
      %15 = vsyncadd [#allocation3], %s14
      %s16 = sshll.u32 [#allocation2], 4
      %s17 = int_to_ptr.vmem [resolvable:$true] %s16
      %22 = dma.hbm_to_vmem [thread:$0]  %s0, 512, %s17, [#allocation3], 256, 256, 16
    $region5: #{tpu_custom_call.1} parent=1 // pred_fallthru
      _
    // Predicated region
    $region6: #{tpu_custom_call.1} parent=1 // pred_check
      _
    $region7: #{tpu_custom_call.1} parent=1 // pred_check_branch
      %24 = sbr.rel (0) target = $region9
    $region8: #{tpu_custom_call.1} parent=1 // pred_region
      %s26 = ssub.s32 12288, 12288
      %27 = vsyncadd [#allocation6], %s26
      %s28 = sshll.u32 [#allocation5], 4
      %s29 = int_to_ptr.vmem [resolvable:$true] %s28
      %34 = dma.hbm_to_vmem [thread:$0]  %s1, 12288, %s29, [#allocation6], 384, 384, 24
    $region9: #{tpu_custom_call.1} parent=1 // pred_fallthru
      _
    // Predicated region
    $region10: #{tpu_custom_call.1} parent=1 // pred_check
      _
    $region11: #{tpu_custom_call.1} parent=1 // pred_check_branch
      %36 = sbr.rel (0) target = $region13
    $region12: #{tpu_custom_call.1} parent=1 // pred_region
      _
    $region13: #{tpu_custom_call.1} parent=1 // pred_fallthru
      _
    // Predicated region
    $region14: #{tpu_custom_call.1} parent=1 // pred_check
      _
    $region15: #{tpu_custom_call.1} parent=1 // pred_check_branch
      %38 = sbr.rel (0) target = $region17
    $region16: #{tpu_custom_call.1} parent=1 // pred_region
      %39 = dma.done [#allocation3], 512
    $region17: #{tpu_custom_call.1} parent=1 // pred_fallthru
      _
    // Predicated region
    $region18: #{tpu_custom_call.1} parent=1 // pred_check
      _
    $region19: #{tpu_custom_call.1} parent=1 // pred_check_branch
      %41 = sbr.rel (0) target = $region21
    $region20: #{tpu_custom_call.1} parent=1 // pred_region
      %42 = dma.done [#allocation6], 12288
    $region21: #{tpu_custom_call.1} parent=1 // pred_fallthru
      _
    %v43 = vld [vmem:[#allocation2] sm:$0xff]
    %v44 = vld [vmem:[#allocation2 + $0x8] sm:$0xff]
    %v45 = vld [vmem:[#allocation2 + $0x10] sm:$0xff]
    %v46 = vld [vmem:[#allocation2 + $0x18] sm:$0xff]
    %v47 = vpack.c.bf16 %v45, %v43
    %v48 = vpack.c.bf16 %v46, %v44
    %v49 = vld [vmem:[#allocation5] sm:$0xff]
    %v50 = vld [vmem:[#allocation5 + $0x8] sm:$0xff]
    %v51 = vld [vmem:[#allocation5 + $0x10] sm:$0xff]
    %v52 = vld [vmem:[#allocation5 + $0x18] sm:$0xff]
    %v53 = vld [vmem:[#allocation5 + $0x20] sm:$0xff]
    %v54 = vld [vmem:[#allocation5 + $0x28] sm:$0xff]
    %v55 = vld [vmem:[#allocation5 + $0x30] sm:$0xff]
    %v56 = vld [vmem:[#allocation5 + $0x38] sm:$0xff]
    %v57 = vld [vmem:[#allocation5 + $0x40] sm:$0xff]
    %v58 = vld [vmem:[#allocation5 + $0x48] sm:$0xff]
    %v59 = vld [vmem:[#allocation5 + $0x50] sm:$0xff]
    %v60 = vld [vmem:[#allocation5 + $0x58] sm:$0xff]
    %v61 = vld [vmem:[#allocation5 + $0x60] sm:$0xff]
    %v62 = vld [vmem:[#allocation5 + $0x68] sm:$0xff]
    %v63 = vld [vmem:[#allocation5 + $0x70] sm:$0xff]
    %v64 = vld [vmem:[#allocation5 + $0x78] sm:$0xff]
    %v65 = vld [vmem:[#allocation5 + $0x80] sm:$0xff]
    %v66 = vld [vmem:[#allocation5 + $0x88] sm:$0xff]
    %v67 = vld [vmem:[#allocation5 + $0x90] sm:$0xff]
    %v68 = vld [vmem:[#allocation5 + $0x98] sm:$0xff]
    %v69 = vld [vmem:[#allocation5 + $0xa0] sm:$0xff]
    %v70 = vld [vmem:[#allocation5 + $0xa8] sm:$0xff]
    %v71 = vld [vmem:[#allocation5 + $0xb0] sm:$0xff]
    %v72 = vld [vmem:[#allocation5 + $0xb8] sm:$0xff]
    %v73 = vld [vmem:[#allocation5 + $0xc0] sm:$0xff]
    %v74 = vld [vmem:[#allocation5 + $0xc8] sm:$0xff]
    %v75 = vld [vmem:[#allocation5 + $0xd0] sm:$0xff]
    %v76 = vld [vmem:[#allocation5 + $0xd8] sm:$0xff]
    %v77 = vld [vmem:[#allocation5 + $0xe0] sm:$0xff]
    %v78 = vld [vmem:[#allocation5 + $0xe8] sm:$0xff]
    %v79 = vld [vmem:[#allocation5 + $0xf0] sm:$0xff]
    %v80 = vld [vmem:[#allocation5 + $0xf8] sm:$0xff]
    %v81 = vld [vmem:[#allocation5 + $0x100] sm:$0xff]
    %v82 = vld [vmem:[#allocation5 + $0x108] sm:$0xff]
    %v83 = vld [vmem:[#allocation5 + $0x110] sm:$0xff]
    %v84 = vld [vmem:[#allocation5 + $0x118] sm:$0xff]
    %v85 = vld [vmem:[#allocation5 + $0x120] sm:$0xff]
    %v86 = vld [vmem:[#allocation5 + $0x128] sm:$0xff]
    %v87 = vld [vmem:[#allocation5 + $0x130] sm:$0xff]
    %v88 = vld [vmem:[#allocation5 + $0x138] sm:$0xff]
    %v89 = vld [vmem:[#allocation5 + $0x140] sm:$0xff]
    %v90 = vld [vmem:[#allocation5 + $0x148] sm:$0xff]
    %v91 = vld [vmem:[#allocation5 + $0x150] sm:$0xff]
    %v92 = vld [vmem:[#allocation5 + $0x158] sm:$0xff]
    %v93 = vld [vmem:[#allocation5 + $0x160] sm:$0xff]
    %v94 = vld [vmem:[#allocation5 + $0x168] sm:$0xff]
    %v95 = vld [vmem:[#allocation5 + $0x170] sm:$0xff]
    %v96 = vld [vmem:[#allocation5 + $0x178] sm:$0xff]
    %v97 = vld [vmem:[#allocation5 + $0x180] sm:$0xff]
    %v98 = vld [vmem:[#allocation5 + $0x188] sm:$0xff]
    %v99 = vld [vmem:[#allocation5 + $0x190] sm:$0xff]
    %v100 = vld [vmem:[#allocation5 + $0x198] sm:$0xff]
    %v101 = vld [vmem:[#allocation5 + $0x1a0] sm:$0xff]
    %v102 = vld [vmem:[#allocation5 + $0x1a8] sm:$0xff]
    %v103 = vld [vmem:[#allocation5 + $0x1b0] sm:$0xff]
    %v104 = vld [vmem:[#allocation5 + $0x1b8] sm:$0xff]
    %v105 = vld [vmem:[#allocation5 + $0x1c0] sm:$0xff]
    %v106 = vld [vmem:[#allocation5 + $0x1c8] sm:$0xff]
    %v107 = vld [vmem:[#allocation5 + $0x1d0] sm:$0xff]
    %v108 = vld [vmem:[#allocation5 + $0x1d8] sm:$0xff]
    %v109 = vld [vmem:[#allocation5 + $0x1e0] sm:$0xff]
    %v110 = vld [vmem:[#allocation5 + $0x1e8] sm:$0xff]
    %v111 = vld [vmem:[#allocation5 + $0x1f0] sm:$0xff]
    %v112 = vld [vmem:[#allocation5 + $0x1f8] sm:$0xff]
    %v113 = vld [vmem:[#allocation5 + $0x200] sm:$0xff]
    %v114 = vld [vmem:[#allocation5 + $0x208] sm:$0xff]
    %v115 = vld [vmem:[#allocation5 + $0x210] sm:$0xff]
    %v116 = vld [vmem:[#allocation5 + $0x218] sm:$0xff]
    %v117 = vld [vmem:[#allocation5 + $0x220] sm:$0xff]
    %v118 = vld [vmem:[#allocation5 + $0x228] sm:$0xff]
    %v119 = vld [vmem:[#allocation5 + $0x230] sm:$0xff]
    %v120 = vld [vmem:[#allocation5 + $0x238] sm:$0xff]
    %v121 = vld [vmem:[#allocation5 + $0x240] sm:$0xff]
    %v122 = vld [vmem:[#allocation5 + $0x248] sm:$0xff]
    %v123 = vld [vmem:[#allocation5 + $0x250] sm:$0xff]
    %v124 = vld [vmem:[#allocation5 + $0x258] sm:$0xff]
    %v125 = vld [vmem:[#allocation5 + $0x260] sm:$0xff]
    %v126 = vld [vmem:[#allocation5 + $0x268] sm:$0xff]
    %v127 = vld [vmem:[#allocation5 + $0x270] sm:$0xff]
    %v128 = vld [vmem:[#allocation5 + $0x278] sm:$0xff]
    %v129 = vld [vmem:[#allocation5 + $0x280] sm:$0xff]
    %v130 = vld [vmem:[#allocation5 + $0x288] sm:$0xff]
    %v131 = vld [vmem:[#allocation5 + $0x290] sm:$0xff]
    %v132 = vld [vmem:[#allocation5 + $0x298] sm:$0xff]
    %v133 = vld [vmem:[#allocation5 + $0x2a0] sm:$0xff]
    %v134 = vld [vmem:[#allocation5 + $0x2a8] sm:$0xff]
    %v135 = vld [vmem:[#allocation5 + $0x2b0] sm:$0xff]
    %v136 = vld [vmem:[#allocation5 + $0x2b8] sm:$0xff]
    %v137 = vld [vmem:[#allocation5 + $0x2c0] sm:$0xff]
    %v138 = vld [vmem:[#allocation5 + $0x2c8] sm:$0xff]
    %v139 = vld [vmem:[#allocation5 + $0x2d0] sm:$0xff]
    %v140 = vld [vmem:[#allocation5 + $0x2d8] sm:$0xff]
    %v141 = vld [vmem:[#allocation5 + $0x2e0] sm:$0xff]
    %v142 = vld [vmem:[#allocation5 + $0x2e8] sm:$0xff]
    %v143 = vld [vmem:[#allocation5 + $0x2f0] sm:$0xff]
    %v144 = vld [vmem:[#allocation5 + $0x2f8] sm:$0xff]
    %v145 = vld [vmem:[%s2] sm:$0x3f]
    %v147 = vlaneseq
    %v148 = vshrl.u32 %v147, 7
    %v149 = vsub.s32 0, %v148
    %v150 = vrot.slane %v145, %v149
    %v151 = vlaneseq
    %v152 = vshrl.u32 %v151, 7
    %v153 = vsub.s32 1, %v152
    %v154 = vrot.slane %v145, %v153
    %v155 = vlaneseq
    %v156 = vshrl.u32 %v155, 7
    %v157 = vsub.s32 2, %v156
    %v158 = vrot.slane %v145, %v157
    %v159 = vlaneseq
    %v160 = vshrl.u32 %v159, 7
    %v161 = vsub.s32 3, %v160
    %v162 = vrot.slane %v145, %v161
    %v163 = vlaneseq
    %v164 = vshrl.u32 %v163, 7
    %v165 = vsub.s32 4, %v164
    %v166 = vrot.slane %v145, %v165
    %v167 = vlaneseq
    %v168 = vshrl.u32 %v167, 7
    %v169 = vsub.s32 5, %v168
    %v170 = vrot.slane %v145, %v169
    %v273 = vunpack.c.l.b16 %v49
    %v274 = vunpack.c.h.b16 %v49
    %v275 = vunpack.c.l.b16 %v50
    %v276 = vunpack.c.h.b16 %v50
    %v277 = vunpack.c.l.b16 %v51
    %v278 = vunpack.c.h.b16 %v51
    %v279 = vunpack.c.l.b16 %v52
    %v280 = vunpack.c.h.b16 %v52
    %v281 = vunpack.c.l.b16 %v53
    %v282 = vunpack.c.h.b16 %v53
    %v283 = vunpack.c.l.b16 %v54
    %v284 = vunpack.c.h.b16 %v54
    %v285 = vunpack.c.l.b16 %v55
    %v286 = vunpack.c.h.b16 %v55
    %v287 = vunpack.c.l.b16 %v56
    %v288 = vunpack.c.h.b16 %v56
    %v289 = vunpack.c.l.b16 %v57
    %v290 = vunpack.c.h.b16 %v57
    %v291 = vunpack.c.l.b16 %v58
    %v292 = vunpack.c.h.b16 %v58
    %v293 = vunpack.c.l.b16 %v59
    %v294 = vunpack.c.h.b16 %v59
    %v295 = vunpack.c.l.b16 %v60
    %v296 = vunpack.c.h.b16 %v60
    %v297 = vunpack.c.l.b16 %v61
    %v298 = vunpack.c.h.b16 %v61
    %v299 = vunpack.c.l.b16 %v62
    %v300 = vunpack.c.h.b16 %v62
    %v301 = vunpack.c.l.b16 %v63
    %v302 = vunpack.c.h.b16 %v63
    %v303 = vunpack.c.l.b16 %v64
    %v304 = vunpack.c.h.b16 %v64
    %v305 = vunpack.c.l.b16 %v65
    %v306 = vunpack.c.h.b16 %v65
    %v307 = vunpack.c.l.b16 %v66
    %v308 = vunpack.c.h.b16 %v66
    %v309 = vunpack.c.l.b16 %v67
    %v310 = vunpack.c.h.b16 %v67
    %v311 = vunpack.c.l.b16 %v68
    %v312 = vunpack.c.h.b16 %v68
    %v313 = vunpack.c.l.b16 %v69
    %v314 = vunpack.c.h.b16 %v69
    %v315 = vunpack.c.l.b16 %v70
    %v316 = vunpack.c.h.b16 %v70
    %v317 = vunpack.c.l.b16 %v71
    %v318 = vunpack.c.h.b16 %v71
    %v319 = vunpack.c.l.b16 %v72
    %v320 = vunpack.c.h.b16 %v72
    %v321 = vunpack.c.l.b16 %v73
    %v322 = vunpack.c.h.b16 %v73
    %v323 = vunpack.c.l.b16 %v74
    %v324 = vunpack.c.h.b16 %v74
    %v325 = vunpack.c.l.b16 %v75
    %v326 = vunpack.c.h.b16 %v75
    %v327 = vunpack.c.l.b16 %v76
    %v328 = vunpack.c.h.b16 %v76
    %v329 = vunpack.c.l.b16 %v77
    %v330 = vunpack.c.h.b16 %v77
    %v331 = vunpack.c.l.b16 %v78
    %v332 = vunpack.c.h.b16 %v78
    %v333 = vunpack.c.l.b16 %v79
    %v334 = vunpack.c.h.b16 %v79
    %v335 = vunpack.c.l.b16 %v80
    %v336 = vunpack.c.h.b16 %v80
    %v337 = vunpack.c.l.b16 %v81
    %v338 = vunpack.c.h.b16 %v81
    %v339 = vunpack.c.l.b16 %v82
    %v340 = vunpack.c.h.b16 %v82
    %v341 = vunpack.c.l.b16 %v83
    %v342 = vunpack.c.h.b16 %v83
    %v343 = vunpack.c.l.b16 %v84
    %v344 = vunpack.c.h.b16 %v84
    %v345 = vunpack.c.l.b16 %v85
    %v346 = vunpack.c.h.b16 %v85
    %v347 = vunpack.c.l.b16 %v86
    %v348 = vunpack.c.h.b16 %v86
    %v349 = vunpack.c.l.b16 %v87
    %v350 = vunpack.c.h.b16 %v87
    %v351 = vunpack.c.l.b16 %v88
    %v352 = vunpack.c.h.b16 %v88
    %v353 = vunpack.c.l.b16 %v89
    %v354 = vunpack.c.h.b16 %v89
    %v355 = vunpack.c.l.b16 %v90
    %v356 = vunpack.c.h.b16 %v90
    %v357 = vunpack.c.l.b16 %v91
    %v358 = vunpack.c.h.b16 %v91
    %v359 = vunpack.c.l.b16 %v92
    %v360 = vunpack.c.h.b16 %v92
    %v361 = vunpack.c.l.b16 %v93
    %v362 = vunpack.c.h.b16 %v93
    %v363 = vunpack.c.l.b16 %v94
    %v364 = vunpack.c.h.b16 %v94
    %v365 = vunpack.c.l.b16 %v95
    %v366 = vunpack.c.h.b16 %v95
    %v367 = vunpack.c.l.b16 %v96
    %v368 = vunpack.c.h.b16 %v96
    %v369 = vunpack.c.l.b16 %v97
    %v370 = vunpack.c.h.b16 %v97
    %v371 = vunpack.c.l.b16 %v98
    %v372 = vunpack.c.h.b16 %v98
    %v373 = vunpack.c.l.b16 %v99
    %v374 = vunpack.c.h.b16 %v99
    %v375 = vunpack.c.l.b16 %v100
    %v376 = vunpack.c.h.b16 %v100
    %v377 = vunpack.c.l.b16 %v101
    %v378 = vunpack.c.h.b16 %v101
    %v379 = vunpack.c.l.b16 %v102
    %v380 = vunpack.c.h.b16 %v102
    %v381 = vunpack.c.l.b16 %v103
    %v382 = vunpack.c.h.b16 %v103
    %v383 = vunpack.c.l.b16 %v104
    %v384 = vunpack.c.h.b16 %v104
    %v385 = vunpack.c.l.b16 %v105
    %v386 = vunpack.c.h.b16 %v105
    %v387 = vunpack.c.l.b16 %v106
    %v388 = vunpack.c.h.b16 %v106
    %v389 = vunpack.c.l.b16 %v107
    %v390 = vunpack.c.h.b16 %v107
    %v391 = vunpack.c.l.b16 %v108
    %v392 = vunpack.c.h.b16 %v108
    %v393 = vunpack.c.l.b16 %v109
    %v394 = vunpack.c.h.b16 %v109
    %v395 = vunpack.c.l.b16 %v110
    %v396 = vunpack.c.h.b16 %v110
    %v397 = vunpack.c.l.b16 %v111
    %v398 = vunpack.c.h.b16 %v111
    %v399 = vunpack.c.l.b16 %v112
    %v400 = vunpack.c.h.b16 %v112
    %v401 = vunpack.c.l.b16 %v113
    %v402 = vunpack.c.h.b16 %v113
    %v403 = vunpack.c.l.b16 %v114
    %v404 = vunpack.c.h.b16 %v114
    %v405 = vunpack.c.l.b16 %v115
    %v406 = vunpack.c.h.b16 %v115
    %v407 = vunpack.c.l.b16 %v116
    %v408 = vunpack.c.h.b16 %v116
    %v409 = vunpack.c.l.b16 %v117
    %v410 = vunpack.c.h.b16 %v117
    %v411 = vunpack.c.l.b16 %v118
    %v412 = vunpack.c.h.b16 %v118
    %v413 = vunpack.c.l.b16 %v119
    %v414 = vunpack.c.h.b16 %v119
    %v415 = vunpack.c.l.b16 %v120
    %v416 = vunpack.c.h.b16 %v120
    %v417 = vunpack.c.l.b16 %v121
    %v418 = vunpack.c.h.b16 %v121
    %v419 = vunpack.c.l.b16 %v122
    %v420 = vunpack.c.h.b16 %v122
    %v421 = vunpack.c.l.b16 %v123
    %v422 = vunpack.c.h.b16 %v123
    %v423 = vunpack.c.l.b16 %v124
    %v424 = vunpack.c.h.b16 %v124
    %v425 = vunpack.c.l.b16 %v125
    %v426 = vunpack.c.h.b16 %v125
    %v427 = vunpack.c.l.b16 %v126
    %v428 = vunpack.c.h.b16 %v126
    %v429 = vunpack.c.l.b16 %v127
    %v430 = vunpack.c.h.b16 %v127
    %v431 = vunpack.c.l.b16 %v128
    %v432 = vunpack.c.h.b16 %v128
    %v433 = vunpack.c.l.b16 %v129
    %v434 = vunpack.c.h.b16 %v129
    %v435 = vunpack.c.l.b16 %v130
    %v436 = vunpack.c.h.b16 %v130
    %v437 = vunpack.c.l.b16 %v131
    %v438 = vunpack.c.h.b16 %v131
    %v439 = vunpack.c.l.b16 %v132
    %v440 = vunpack.c.h.b16 %v132
    %v441 = vunpack.c.l.b16 %v133
    %v442 = vunpack.c.h.b16 %v133
    %v443 = vunpack.c.l.b16 %v134
    %v444 = vunpack.c.h.b16 %v134
    %v445 = vunpack.c.l.b16 %v135
    %v446 = vunpack.c.h.b16 %v135
    %v447 = vunpack.c.l.b16 %v136
    %v448 = vunpack.c.h.b16 %v136
    %v449 = vunpack.c.l.b16 %v137
    %v450 = vunpack.c.h.b16 %v137
    %v451 = vunpack.c.l.b16 %v138
    %v452 = vunpack.c.h.b16 %v138
    %v453 = vunpack.c.l.b16 %v139
    %v454 = vunpack.c.h.b16 %v139
    %v455 = vunpack.c.l.b16 %v140
    %v456 = vunpack.c.h.b16 %v140
    %v457 = vunpack.c.l.b16 %v141
    %v458 = vunpack.c.h.b16 %v141
    %v459 = vunpack.c.l.b16 %v142
    %v460 = vunpack.c.h.b16 %v142
    %v461 = vunpack.c.l.b16 %v143
    %v462 = vunpack.c.h.b16 %v143
    %v463 = vunpack.c.l.b16 %v144
    %v464 = vunpack.c.h.b16 %v144
    %v465 = vpack.c.b16 %v279, %v273
    %v466 = vpack.c.b16 %v280, %v274
    %v467 = vpack.c.b16 %v281, %v275
    %v468 = vpack.c.b16 %v282, %v276
    %v469 = vpack.c.b16 %v283, %v277
    %v470 = vpack.c.b16 %v284, %v278
    %v471 = vpack.c.b16 %v291, %v285
    %v472 = vpack.c.b16 %v292, %v286
    %v473 = vpack.c.b16 %v293, %v287
    %v474 = vpack.c.b16 %v294, %v288
    %v475 = vpack.c.b16 %v295, %v289
    %v476 = vpack.c.b16 %v296, %v290
    %v477 = vpack.c.b16 %v303, %v297
    %v478 = vpack.c.b16 %v304, %v298
    %v479 = vpack.c.b16 %v305, %v299
    %v480 = vpack.c.b16 %v306, %v300
    %v481 = vpack.c.b16 %v307, %v301
    %v482 = vpack.c.b16 %v308, %v302
    %v483 = vpack.c.b16 %v315, %v309
    %v484 = vpack.c.b16 %v316, %v310
    %v485 = vpack.c.b16 %v317, %v311
    %v486 = vpack.c.b16 %v318, %v312
    %v487 = vpack.c.b16 %v319, %v313
    %v488 = vpack.c.b16 %v320, %v314
    %v489 = vpack.c.b16 %v327, %v321
    %v490 = vpack.c.b16 %v328, %v322
    %v491 = vpack.c.b16 %v329, %v323
    %v492 = vpack.c.b16 %v330, %v324
    %v493 = vpack.c.b16 %v331, %v325
    %v494 = vpack.c.b16 %v332, %v326
    %v495 = vpack.c.b16 %v339, %v333
    %v496 = vpack.c.b16 %v340, %v334
    %v497 = vpack.c.b16 %v341, %v335
    %v498 = vpack.c.b16 %v342, %v336
    %v499 = vpack.c.b16 %v343, %v337
    %v500 = vpack.c.b16 %v344, %v338
    %v501 = vpack.c.b16 %v351, %v345
    %v502 = vpack.c.b16 %v352, %v346
    %v503 = vpack.c.b16 %v353, %v347
    %v504 = vpack.c.b16 %v354, %v348
    %v505 = vpack.c.b16 %v355, %v349
    %v506 = vpack.c.b16 %v356, %v350
    %v507 = vpack.c.b16 %v363, %v357
    %v508 = vpack.c.b16 %v364, %v358
    %v509 = vpack.c.b16 %v365, %v359
    %v510 = vpack.c.b16 %v366, %v360
    %v511 = vpack.c.b16 %v367, %v361
    %v512 = vpack.c.b16 %v368, %v362
    %v513 = vpack.c.b16 %v375, %v369
    %v514 = vpack.c.b16 %v376, %v370
    %v515 = vpack.c.b16 %v377, %v371
    %v516 = vpack.c.b16 %v378, %v372
    %v517 = vpack.c.b16 %v379, %v373
    %v518 = vpack.c.b16 %v380, %v374
    %v519 = vpack.c.b16 %v387, %v381
    %v520 = vpack.c.b16 %v388, %v382
    %v521 = vpack.c.b16 %v389, %v383
    %v522 = vpack.c.b16 %v390, %v384
    %v523 = vpack.c.b16 %v391, %v385
    %v524 = vpack.c.b16 %v392, %v386
    %v525 = vpack.c.b16 %v399, %v393
    %v526 = vpack.c.b16 %v400, %v394
    %v527 = vpack.c.b16 %v401, %v395
    %v528 = vpack.c.b16 %v402, %v396
    %v529 = vpack.c.b16 %v403, %v397
    %v530 = vpack.c.b16 %v404, %v398
    %v531 = vpack.c.b16 %v411, %v405
    %v532 = vpack.c.b16 %v412, %v406
    %v533 = vpack.c.b16 %v413, %v407
    %v534 = vpack.c.b16 %v414, %v408
    %v535 = vpack.c.b16 %v415, %v409
    %v536 = vpack.c.b16 %v416, %v410
    %v537 = vpack.c.b16 %v423, %v417
    %v538 = vpack.c.b16 %v424, %v418
    %v539 = vpack.c.b16 %v425, %v419
    %v540 = vpack.c.b16 %v426, %v420
    %v541 = vpack.c.b16 %v427, %v421
    %v542 = vpack.c.b16 %v428, %v422
    %v543 = vpack.c.b16 %v435, %v429
    %v544 = vpack.c.b16 %v436, %v430
    %v545 = vpack.c.b16 %v437, %v431
    %v546 = vpack.c.b16 %v438, %v432
    %v547 = vpack.c.b16 %v439, %v433
    %v548 = vpack.c.b16 %v440, %v434
    %v549 = vpack.c.b16 %v447, %v441
    %v550 = vpack.c.b16 %v448, %v442
    %v551 = vpack.c.b16 %v449, %v443
    %v552 = vpack.c.b16 %v450, %v444
    %v553 = vpack.c.b16 %v451, %v445
    %v554 = vpack.c.b16 %v452, %v446
    %v555 = vpack.c.b16 %v459, %v453
    %v556 = vpack.c.b16 %v460, %v454
    %v557 = vpack.c.b16 %v461, %v455
    %v558 = vpack.c.b16 %v462, %v456
    %v559 = vpack.c.b16 %v463, %v457
    %v560 = vpack.c.b16 %v464, %v458
    %657 = vmatprep.subr.bf16.mxu0 %v466
    %658 = vmatpush1.bf16.msra.mxu0 %v465
    %659 = vmatprep.subr.bf16.mxu0 %v472
    %660 = vmatpush1.bf16.msra.mxu0 %v471
    %661 = vmatprep.subr.bf16.mxu0 %v478
    %662 = vmatpush1.bf16.msra.mxu0 %v477
    %663 = vmatprep.subr.bf16.mxu0 %v484
    %664 = vmatpush1.bf16.msra.mxu0 %v483
    %665 = vmatprep.subr.bf16.mxu0 %v490
    %666 = vmatpush1.bf16.msra.mxu0 %v489
    %667 = vmatprep.subr.bf16.mxu0 %v496
    %668 = vmatpush1.bf16.msra.mxu0 %v495
    %669 = vmatprep.subr.bf16.mxu0 %v502
    %670 = vmatpush1.bf16.msra.mxu0 %v501
    %671 = vmatprep.subr.bf16.mxu0 %v508
    %672 = vmatpush1.bf16.msra.mxu0 %v507
    %673 = vmatprep.subr.bf16.mxu0 %v514
    %674 = vmatpush1.bf16.msra.mxu0 %v513
    %675 = vmatprep.subr.bf16.mxu0 %v520
    %676 = vmatpush1.bf16.msra.mxu0 %v519
    %677 = vmatprep.subr.bf16.mxu0 %v526
    %678 = vmatpush1.bf16.msra.mxu0 %v525
    %679 = vmatprep.subr.bf16.mxu0 %v532
    %680 = vmatpush1.bf16.msra.mxu0 %v531
    %681 = vmatprep.subr.bf16.mxu0 %v538
    %682 = vmatpush1.bf16.msra.mxu0 %v537
    %683 = vmatprep.subr.bf16.mxu0 %v544
    %684 = vmatpush1.bf16.msra.mxu0 %v543
    %685 = vmatprep.subr.bf16.mxu0 %v550
    %686 = vmatpush1.bf16.msra.mxu0 %v549
    %687 = vmatprep.subr.bf16.mxu0 %v556
    %688 = vmatpush1.bf16.msra.mxu0 %v555
    %689 = vmatprep.mubr.bf16.mxu0 %v48
    %690 = vmatmul.mubr.bf16.gmra.mrb[0].mxu0 %v47
    %v691 = vpop.f32.mrb[0].mxu0
    %v692 = vadd.f32 %v150, %v691
    %v693 = vpop.f32.mrb[0].mxu0
    %v694 = vadd.f32 %v154, %v693
    %v695 = vpop.f32.mrb[0].mxu0
    %v696 = vadd.f32 %v150, %v695
    %v697 = vpop.f32.mrb[0].mxu0
    %v698 = vadd.f32 %v154, %v697
    %699 = vdwg.mxu0
    %700 = vmatprep.subr.bf16.mxu0 %v468
    %701 = vmatpush1.bf16.msra.mxu0 %v467
    %702 = vmatprep.subr.bf16.mxu0 %v474
    %703 = vmatpush1.bf16.msra.mxu0 %v473
    %704 = vmatprep.subr.bf16.mxu0 %v480
    %705 = vmatpush1.bf16.msra.mxu0 %v479
    %706 = vmatprep.subr.bf16.mxu0 %v486
    %707 = vmatpush1.bf16.msra.mxu0 %v485
    %708 = vmatprep.subr.bf16.mxu0 %v492
    %709 = vmatpush1.bf16.msra.mxu0 %v491
    %710 = vmatprep.subr.bf16.mxu0 %v498
    %711 = vmatpush1.bf16.msra.mxu0 %v497
    %712 = vmatprep.subr.bf16.mxu0 %v504
    %713 = vmatpush1.bf16.msra.mxu0 %v503
    %714 = vmatprep.subr.bf16.mxu0 %v510
    %715 = vmatpush1.bf16.msra.mxu0 %v509
    %716 = vmatprep.subr.bf16.mxu0 %v516
    %717 = vmatpush1.bf16.msra.mxu0 %v515
    %718 = vmatprep.subr.bf16.mxu0 %v522
    %719 = vmatpush1.bf16.msra.mxu0 %v521
    %720 = vmatprep.subr.bf16.mxu0 %v528
    %721 = vmatpush1.bf16.msra.mxu0 %v527
    %722 = vmatprep.subr.bf16.mxu0 %v534
    %723 = vmatpush1.bf16.msra.mxu0 %v533
    %724 = vmatprep.subr.bf16.mxu0 %v540
    %725 = vmatpush1.bf16.msra.mxu0 %v539
    %726 = vmatprep.subr.bf16.mxu0 %v546
    %727 = vmatpush1.bf16.msra.mxu0 %v545
    %728 = vmatprep.subr.bf16.mxu0 %v552
    %729 = vmatpush1.bf16.msra.mxu0 %v551
    %730 = vmatprep.subr.bf16.mxu0 %v558
    %731 = vmatpush1.bf16.msra.mxu0 %v557
    %732 = vmatprep.mubr.bf16.mxu0 %v48
    %733 = vmatmul.mubr.bf16.gmra.mrb[0].mxu0 %v47
    %v734 = vpop.f32.mrb[0].mxu0
    %v735 = vadd.f32 %v158, %v734
    %v736 = vpop.f32.mrb[0].mxu0
    %v737 = vadd.f32 %v162, %v736
    %v738 = vpop.f32.mrb[0].mxu0
    %v739 = vadd.f32 %v158, %v738
    %v740 = vpop.f32.mrb[0].mxu0
    %v741 = vadd.f32 %v162, %v740
    %742 = vdwg.mxu0
    %743 = vmatprep.subr.bf16.mxu0 %v470
    %744 = vmatpush1.bf16.msra.mxu0 %v469
    %745 = vmatprep.subr.bf16.mxu0 %v476
    %746 = vmatpush1.bf16.msra.mxu0 %v475
    %747 = vmatprep.subr.bf16.mxu0 %v482
    %748 = vmatpush1.bf16.msra.mxu0 %v481
    %749 = vmatprep.subr.bf16.mxu0 %v488
    %750 = vmatpush1.bf16.msra.mxu0 %v487
    %751 = vmatprep.subr.bf16.mxu0 %v494
    %752 = vmatpush1.bf16.msra.mxu0 %v493
    %753 = vmatprep.subr.bf16.mxu0 %v500
    %754 = vmatpush1.bf16.msra.mxu0 %v499
    %755 = vmatprep.subr.bf16.mxu0 %v506
    %756 = vmatpush1.bf16.msra.mxu0 %v505
    %757 = vmatprep.subr.bf16.mxu0 %v512
    %758 = vmatpush1.bf16.msra.mxu0 %v511
    %759 = vmatprep.subr.bf16.mxu0 %v518
    %760 = vmatpush1.bf16.msra.mxu0 %v517
    %761 = vmatprep.subr.bf16.mxu0 %v524
    %762 = vmatpush1.bf16.msra.mxu0 %v523
    %763 = vmatprep.subr.bf16.mxu0 %v530
    %764 = vmatpush1.bf16.msra.mxu0 %v529
    %765 = vmatprep.subr.bf16.mxu0 %v536
    %766 = vmatpush1.bf16.msra.mxu0 %v535
    %767 = vmatprep.subr.bf16.mxu0 %v542
    %768 = vmatpush1.bf16.msra.mxu0 %v541
    %769 = vmatprep.subr.bf16.mxu0 %v548
    %770 = vmatpush1.bf16.msra.mxu0 %v547
    %771 = vmatprep.subr.bf16.mxu0 %v554
    %772 = vmatpush1.bf16.msra.mxu0 %v553
    %773 = vmatprep.subr.bf16.mxu0 %v560
    %774 = vmatpush1.bf16.msra.mxu0 %v559
    %775 = vmatprep.mubr.bf16.mxu0 %v48
    %776 = vmatmul.mubr.bf16.gmra.mrb[0].mxu0 %v47
    %v777 = vpop.f32.mrb[0].mxu0
    %v778 = vadd.f32 %v166, %v777
    %v779 = vpop.f32.mrb[0].mxu0
    %v780 = vadd.f32 %v170, %v779
    %v781 = vpop.f32.mrb[0].mxu0
    %v782 = vadd.f32 %v166, %v781
    %v783 = vpop.f32.mrb[0].mxu0
    %v784 = vadd.f32 %v170, %v783
    %785 = vdwg.mxu0
    %v786 = vpack.c.bf16 %v696, %v692
    %v787 = vpack.c.bf16 %v698, %v694
    %v788 = vpack.c.bf16 %v739, %v735
    %v789 = vpack.c.bf16 %v741, %v737
    %v790 = vpack.c.bf16 %v782, %v778
    %v791 = vpack.c.bf16 %v784, %v780
    %v798 = vunpack.c.l.b16 %v786
    %v799 = vunpack.c.l.b16 %v787
    %v800 = vunpack.c.l.b16 %v788
    %v801 = vunpack.c.l.b16 %v789
    %v802 = vunpack.c.l.b16 %v790
    %v803 = vunpack.c.l.b16 %v791
    %v804 = vunpack.c.h.b16 %v786
    %v805 = vunpack.c.h.b16 %v787
    %v806 = vunpack.c.h.b16 %v788
    %v807 = vunpack.c.h.b16 %v789
    %v808 = vunpack.c.h.b16 %v790
    %v809 = vunpack.c.h.b16 %v791
    %v810 = vpack.c.b16 %v799, %v798
    %v811 = vpack.c.b16 %v801, %v800
    %v812 = vpack.c.b16 %v803, %v802
    %v813 = vpack.c.b16 %v805, %v804
    %v814 = vpack.c.b16 %v807, %v806
    %v815 = vpack.c.b16 %v809, %v808
    %822 = vst [vmem:[#allocation7] sm:$0xff] %v810
    %823 = vst [vmem:[#allocation7 + $0x8] sm:$0xff] %v811
    %824 = vst [vmem:[#allocation7 + $0x10] sm:$0xff] %v812
    %825 = vst [vmem:[#allocation7 + $0x18] sm:$0xff] %v813
    %826 = vst [vmem:[#allocation7 + $0x20] sm:$0xff] %v814
    %827 = vst [vmem:[#allocation7 + $0x28] sm:$0xff] %v815
    // Predicated region
    $region22: #{tpu_custom_call.1} parent=1 // pred_check
      _
    $region23: #{tpu_custom_call.1} parent=1 // pred_check_branch
      %829 = sbr.rel (0) target = $region25
    $region24: #{tpu_custom_call.1} parent=1 // pred_region
      %s831 = ssub.s32 768, 768
      %832 = vsyncadd [#allocation4], %s831
      %s833 = sshll.u32 [#allocation7], 4
      %s834 = int_to_ptr.vmem [resolvable:$true] %s833
      %839 = dma.vmem_to_hbm [thread:$0]  %s834, 768, %s3, [#allocation4], 384, 384, 24
    $region25: #{tpu_custom_call.1} parent=1 // pred_fallthru
      _
    // Predicated region
    $region26: #{tpu_custom_call.1} parent=1 // pred_check
      _
    $region27: #{tpu_custom_call.1} parent=1 // pred_check_branch
      %841 = sbr.rel (0) target = $region29
    $region28: #{tpu_custom_call.1} parent=1 // pred_region
      %842 = dma.done [#allocation4], 768
    $region29: #{tpu_custom_call.1} parent=1 // pred_fallthru
      _
    %843 = vsyncpa [#allocation3], 1
    %844 = vsyncpa [#allocation6], 1
    %845 = vsyncpa [#allocation4], 1

</llo_original>
